<compile_context>
chip_gen: v6e
topology: v6e:2x2x1
jax: 0.10.0
libtpu: 0.0.40
codegen_flags: <defaults>
</compile_context>

<pallas_src>
import jax
import jax.numpy as jnp
from jax.experimental import pallas as pl
from jax.experimental.pallas import tpu as pltpu

BN_EPS = 1e-5
_LANE = 128
_SUBLANE = 16                 # bf16-safe sublane alignment for batch tiles
_SINGLE_STEP_MAX_ROWS = 2048  # below this, one grid step beats pipelining/megacore


def _round_up(x, m):
    return ((x + m - 1) // m) * m


# --------------------------------------------------------------------------- kernel
def _mlp_kernel(x_ref, w1_ref, wslab_ref, bslab_ref, out_ref):
    """Whole forward pass (fc1..fc5, BN pre-folded, ReLU) for one lane-dense batch tile."""
    cdt = w1_ref.dtype  # compute dtype of the streamed tensors (bf16 by default)

    # fc1 -> bn1 -> relu   (dropout = identity in eval mode)
    h = jnp.dot(x_ref[...], w1_ref[...], preferred_element_type=jnp.float32)
    h = jnp.maximum(h + bslab_ref[0], 0.0)

    # fc2..fc4 -> bn -> relu
    for li in range(3):
        z = jnp.dot(h.astype(cdt), wslab_ref[li], preferred_element_type=jnp.float32)
        h = jnp.maximum(z + bslab_ref[li + 1], 0.0)

    # fc5 (no BN / ReLU), lane-padded to 128 output columns
    out = jnp.dot(h.astype(cdt), wslab_ref[3], preferred_element_type=jnp.float32) + bslab_ref[4]
    out_ref[...] = out.astype(out_ref.dtype)


# --------------------------------------------------------------- host-side parameter prep
def fold_bn_params(params):
    """Fold eval-mode BatchNorm1d into the preceding Linear's weight/bias."""
    folded = {}
    for li in range(1, 5):
        scale = params[f"g{li}"] * jax.lax.rsqrt(params[f"v{li}"] + BN_EPS)       # (1, C)
        folded[f"w{li}"] = params[f"w{li}"] * scale                                # scale cols
        folded[f"b{li}"] = (params[f"b{li}"] - params[f"m{li}"]) * scale + params[f"be{li}"]
    folded["w5"] = params["w5"]
    folded["b5"] = params["b5"]
    return folded


def _pack_params(params, num_classes, compute_dtype):
    """Fold BN, zero-pad every layer to lane width, pack into 3 slabs."""
    p = fold_bn_params(params)
    in_features = p["w1"].shape[0]
    wpad = _round_up(max(64, num_classes), _LANE)    # common width for hidden/output slabs
    d_pad = _round_up(in_features, _LANE)

    def pad2(a, rows, cols):
        return jnp.pad(a, ((0, rows - a.shape[0]), (0, cols - a.shape[1])))

    w1p = pad2(p["w1"], d_pad, wpad).astype(compute_dtype)                        # (d_pad, wpad)
    wslab = jnp.stack([pad2(p[f"w{li}"], wpad, wpad) for li in range(2, 6)])      # (4, wpad, wpad)
    wslab = wslab.astype(compute_dtype)
    bslab = jnp.stack(
        [jnp.pad(p[f"b{li}"].reshape(-1), (0, wpad - p[f"b{li}"].size)) for li in range(1, 6)]
    ).astype(jnp.float32)                                                          # (5, wpad)
    return w1p, wslab, bslab, d_pad, wpad


# --------------------------------------------------------------- VMEM budgeting / tiling
def _vmem_bytes(batch_tile, d_pad, wpad, x_itemsize, w_itemsize):
    x_stream = 2 * batch_tile * d_pad * x_itemsize            # double-buffered input tile
    out_stream = 2 * batch_tile * wpad * 4                    # double-buffered f32 output tile
    params = 2 * (d_pad * wpad + 4 * wpad * wpad) * w_itemsize + 2 * 5 * wpad * 4
    acts = batch_tile * wpad * (3 * 4 + 2 * x_itemsize)       # live f32 activations + bf16 casts
    return x_stream + out_stream + params + acts


def _vmem_capacity_bytes():
    try:
        return int(pltpu.get_tpu_info().vmem_capacity_bytes)
    except Exception:
        return 64 * 1024 * 1024   # conservative default (v7x physical VMEM per TC)


def _select_batch_tile(B, d_pad, wpad, x_itemsize, w_itemsize):
    b_aligned = _round_up(B, _SUBLANE)
    if b_aligned <= _SINGLE_STEP_MAX_ROWS:
        # Single grid step: no per-step overhead, no cross-core split for tiny work.
        return b_aligned
    budget = _vmem_capacity_bytes() // 3   # leave compiler-scratch headroom (v7x ~21 MiB)
    for tile in (4096, 2048, 1024):
        if _vmem_bytes(tile, d_pad, wpad, x_itemsize, w_itemsize) <= budget:
            return tile
    return 1024


# ------------------------------------------------------------------------------ wrapper
def first_mlp_forward(x, params, *, compute_dtype=jnp.bfloat16, batch_tile=None,
                      trim_output=True):
    """x: (B, input_size) float32.  params: dict of raw weights (see init_params).

    Note: when trim_output=False, the returned (B_pad, 128) slab contains nonzero
    garbage in padded rows/columns; only [:B, :num_classes] is meaningful.
    """
    B, in_features = x.shape
    num_classes = params["w5"].shape[1]

    w1p, wslab, bslab, d_pad, wpad = _pack_params(params, num_classes, compute_dtype)
    x_isz = jnp.dtype(compute_dtype).itemsize

    if batch_tile is None:
        batch_tile = _select_batch_tile(B, d_pad, wpad, x_isz, x_isz)
    if batch_tile % _SUBLANE != 0:
        raise ValueError(f"batch_tile must be a multiple of {_SUBLANE} (got {batch_tile})")

    B_pad = _round_up(B, batch_tile)
    xp = x
    if (B_pad, d_pad) != (B, in_features):
        xp = jnp.pad(x, ((0, B_pad - B), (0, d_pad - in_features)))
    xp = xp.astype(compute_dtype)

    grid_steps = B_pad // batch_tile
    vmem_limit = _vmem_bytes(batch_tile, d_pad, wpad, x_isz, x_isz) + (8 << 20)

    out_full = pl.pallas_call(
        _mlp_kernel,
        out_shape=jax.ShapeDtypeStruct((B_pad, wpad), jnp.float32),
        grid_spec=pltpu.PrefetchScalarGridSpec(
            num_scalar_prefetch=0,
            grid=(grid_steps,),
            in_specs=[
                pl.BlockSpec((batch_tile, d_pad), lambda i: (i, 0)),   # streamed x tile
                pl.BlockSpec((d_pad, wpad), lambda i: (0, 0)),         # fc1 weights (resident)
                pl.BlockSpec((4, wpad, wpad), lambda i: (0, 0, 0)),    # fc2..fc5 weight slab
                pl.BlockSpec((5, wpad), lambda i: (0, 0)),             # bias slab (f32)
            ],
            out_specs=pl.BlockSpec((batch_tile, wpad), lambda i: (i, 0)),
        ),
        compiler_params=pltpu.CompilerParams(
            dimension_semantics=("parallel",) if grid_steps > 1 else ("arbitrary",),
            vmem_limit_bytes=int(vmem_limit),
        ),
    )(xp, w1p, wslab, bslab)

    if trim_output:
        return out_full[:B, :num_classes]
    return out_full


# ------------------------------------------------------------------------ init / reference
def init_params(key, input_size, num_classes):
    """Deterministic init mirroring First_MLP.__init__ shapes.

    Linear weights are stored as (in, out) (transposed vs. PyTorch's (out, in)).
    BN running stats / affine params are randomized so the folding path is exercised.
    """
    dims = [input_size, 32, 64, 32, 16, num_classes]
    params = {}
    keys = jax.random.split(key, 30)
    ki = 0
    for li in range(5):
        fan_in, fan_out = dims[li], dims[li + 1]
        bound = 1.0 / jnp.sqrt(jnp.float32(fan_in))
        params[f"w{li + 1}"] = jax.random.uniform(
            keys[ki], (fan_in, fan_out), jnp.float32, -bound, bound); ki += 1
        params[f"b{li + 1}"] = jax.random.uniform(
            keys[ki], (1, fan_out), jnp.float32, -bound, bound); ki += 1
        if li < 4:  # bn1..bn4
            params[f"g{li + 1}"] = 1.0 + 0.1 * jax.random.normal(keys[ki], (1, fan_out), jnp.float32); ki += 1
            params[f"be{li + 1}"] = 0.1 * jax.random.normal(keys[ki], (1, fan_out), jnp.float32); ki += 1
            params[f"m{li + 1}"] = 0.1 * jax.random.normal(keys[ki], (1, fan_out), jnp.float32); ki += 1
            params[f"v{li + 1}"] = jax.random.uniform(keys[ki], (1, fan_out), jnp.float32, 0.5, 1.5); ki += 1
    return params


def _reference_forward(x, p):
    """Plain-JAX f32 reference (explicit eval-mode BN) for the correctness check."""
    h = x
    for li in range(1, 5):
        h = h @ p[f"w{li}"] + p[f"b{li}"]
        h = (h - p[f"m{li}"]) * jax.lax.rsqrt(p[f"v{li}"] + BN_EPS) * p[f"g{li}"] + p[f"be{li}"]
        h = jnp.maximum(h, 0.0)
    return h @ p["w5"] + p["b5"]


if __name__ == "__main__":
    key = jax.random.PRNGKey(0)
    kp, kx = jax.random.split(key)

    batch = 128
    input_size = 64
    num_classes = 10

    params = init_params(kp, input_size, num_classes)
    x = jax.random.normal(kx, (batch, input_size), jnp.float32)

    out = first_mlp_forward(x, params)        # single grid step (128 rows), bf16 streams
    out = jax.block_until_ready(out)

    ref = _reference_forward(x, params)
    assert out.shape == (batch, num_classes)
    # bf16 streamed tensors -> looser tolerance vs. the f32 reference.
    assert jnp.allclose(out, ref, atol=3e-2, rtol=3e-2)

    print("KERNEL_OK")
</pallas_src>

<mosaic_0001>
module attributes {stable_mosaic.version = 11 : i64} {
  func.func @_mlp_kernel(%arg0: i32, %arg1: memref<128x128xbf16, #tpu.memory_space<vmem>>, %arg2: memref<128x128xbf16, #tpu.memory_space<vmem>>, %arg3: memref<4x128x128xbf16, #tpu.memory_space<vmem>>, %arg4: memref<5x128xf32, #tpu.memory_space<vmem>>, %arg5: memref<128x128xf32, #tpu.memory_space<vmem>>) attributes {dimension_semantics = [#tpu.dimension_semantics<arbitrary>], iteration_bounds = array<i64: 1>, scalar_prefetch = 0 : i64, scratch_operands = 0 : i64, tpu.core_type = #tpu.core_type<tc>, window_params = [{transform_indices = @transform_0, window_bounds = array<i64: 128, 128>}, {pipeline_mode = #tpu.pipeline_mode<synchronous>, transform_indices = @transform_1, window_bounds = array<i64: 128, 128>}, {pipeline_mode = #tpu.pipeline_mode<synchronous>, transform_indices = @transform_2, window_bounds = array<i64: 4, 128, 128>}, {pipeline_mode = #tpu.pipeline_mode<synchronous>, transform_indices = @transform_3, window_bounds = array<i64: 5, 128>}, {transform_indices = @transform_4, window_bounds = array<i64: 128, 128>}]} {
    %c0 = arith.constant 0 : index
    %c0_0 = arith.constant 0 : index
    %0 = vector.load %arg1[%c0, %c0_0] : memref<128x128xbf16, #tpu.memory_space<vmem>>, vector<128x128xbf16>
    %c0_1 = arith.constant 0 : index
    %c0_2 = arith.constant 0 : index
    %1 = vector.load %arg2[%c0_1, %c0_2] : memref<128x128xbf16, #tpu.memory_space<vmem>>, vector<128x128xbf16>
    %cst = arith.constant dense<0.000000e+00> : vector<128x128xf32>
    %2 = tpu.matmul %0, %1, %cst {dimension_numbers = #tpu.dot_dimension_numbers<[1], [0], [0], [1], [0, 0, 1, 1], [], []>} : vector<128x128xbf16>, vector<128x128xbf16>, vector<128x128xf32> -> vector<128x128xf32>
    %c0_3 = arith.constant 0 : index
    %c0_4 = arith.constant 0 : index
    %3 = vector.load %arg4[%c0_3, %c0_4] : memref<5x128xf32, #tpu.memory_space<vmem>>, vector<1x128xf32>
    %4 = vector.shape_cast %3 : vector<1x128xf32> to vector<128xf32>
    %5 = vector.shape_cast %4 : vector<128xf32> to vector<1x128xf32>
    %6 = vector.broadcast %5 : vector<1x128xf32> to vector<128x128xf32>
    %7 = arith.addf %2, %6 : vector<128x128xf32>
    %cst_5 = arith.constant 0.000000e+00 : f32
    %8 = vector.broadcast %cst_5 : f32 to vector<128x128xf32>
    %9 = arith.maximumf %7, %8 : vector<128x128xf32>
    %10 = arith.truncf %9 : vector<128x128xf32> to vector<128x128xbf16>
    %c0_6 = arith.constant 0 : index
    %c0_7 = arith.constant 0 : index
    %c0_8 = arith.constant 0 : index
    %11 = vector.load %arg3[%c0_6, %c0_7, %c0_8] : memref<4x128x128xbf16, #tpu.memory_space<vmem>>, vector<1x128x128xbf16>
    %12 = vector.shape_cast %11 : vector<1x128x128xbf16> to vector<128x128xbf16>
    %cst_9 = arith.constant dense<0.000000e+00> : vector<128x128xf32>
    %13 = tpu.matmul %10, %12, %cst_9 {dimension_numbers = #tpu.dot_dimension_numbers<[1], [0], [0], [1], [0, 0, 1, 1], [], []>} : vector<128x128xbf16>, vector<128x128xbf16>, vector<128x128xf32> -> vector<128x128xf32>
    %c1 = arith.constant 1 : index
    %c0_10 = arith.constant 0 : index
    %14 = vector.load %arg4[%c1, %c0_10] : memref<5x128xf32, #tpu.memory_space<vmem>>, vector<1x128xf32>
    %15 = vector.shape_cast %14 : vector<1x128xf32> to vector<128xf32>
    %16 = vector.shape_cast %15 : vector<128xf32> to vector<1x128xf32>
    %17 = vector.broadcast %16 : vector<1x128xf32> to vector<128x128xf32>
    %18 = arith.addf %13, %17 : vector<128x128xf32>
    %cst_11 = arith.constant 0.000000e+00 : f32
    %19 = vector.broadcast %cst_11 : f32 to vector<128x128xf32>
    %20 = arith.maximumf %18, %19 : vector<128x128xf32>
    %21 = arith.truncf %20 : vector<128x128xf32> to vector<128x128xbf16>
    %c1_12 = arith.constant 1 : index
    %c0_13 = arith.constant 0 : index
    %c0_14 = arith.constant 0 : index
    %22 = vector.load %arg3[%c1_12, %c0_13, %c0_14] : memref<4x128x128xbf16, #tpu.memory_space<vmem>>, vector<1x128x128xbf16>
    %23 = vector.shape_cast %22 : vector<1x128x128xbf16> to vector<128x128xbf16>
    %cst_15 = arith.constant dense<0.000000e+00> : vector<128x128xf32>
    %24 = tpu.matmul %21, %23, %cst_15 {dimension_numbers = #tpu.dot_dimension_numbers<[1], [0], [0], [1], [0, 0, 1, 1], [], []>} : vector<128x128xbf16>, vector<128x128xbf16>, vector<128x128xf32> -> vector<128x128xf32>
    %c2 = arith.constant 2 : index
    %c0_16 = arith.constant 0 : index
    %25 = vector.load %arg4[%c2, %c0_16] : memref<5x128xf32, #tpu.memory_space<vmem>>, vector<1x128xf32>
    %26 = vector.shape_cast %25 : vector<1x128xf32> to vector<128xf32>
    %27 = vector.shape_cast %26 : vector<128xf32> to vector<1x128xf32>
    %28 = vector.broadcast %27 : vector<1x128xf32> to vector<128x128xf32>
    %29 = arith.addf %24, %28 : vector<128x128xf32>
    %cst_17 = arith.constant 0.000000e+00 : f32
    %30 = vector.broadcast %cst_17 : f32 to vector<128x128xf32>
    %31 = arith.maximumf %29, %30 : vector<128x128xf32>
    %32 = arith.truncf %31 : vector<128x128xf32> to vector<128x128xbf16>
    %c2_18 = arith.constant 2 : index
    %c0_19 = arith.constant 0 : index
    %c0_20 = arith.constant 0 : index
    %33 = vector.load %arg3[%c2_18, %c0_19, %c0_20] : memref<4x128x128xbf16, #tpu.memory_space<vmem>>, vector<1x128x128xbf16>
    %34 = vector.shape_cast %33 : vector<1x128x128xbf16> to vector<128x128xbf16>
    %cst_21 = arith.constant dense<0.000000e+00> : vector<128x128xf32>
    %35 = tpu.matmul %32, %34, %cst_21 {dimension_numbers = #tpu.dot_dimension_numbers<[1], [0], [0], [1], [0, 0, 1, 1], [], []>} : vector<128x128xbf16>, vector<128x128xbf16>, vector<128x128xf32> -> vector<128x128xf32>
    %c3 = arith.constant 3 : index
    %c0_22 = arith.constant 0 : index
    %36 = vector.load %arg4[%c3, %c0_22] : memref<5x128xf32, #tpu.memory_space<vmem>>, vector<1x128xf32>
    %37 = vector.shape_cast %36 : vector<1x128xf32> to vector<128xf32>
    %38 = vector.shape_cast %37 : vector<128xf32> to vector<1x128xf32>
    %39 = vector.broadcast %38 : vector<1x128xf32> to vector<128x128xf32>
    %40 = arith.addf %35, %39 : vector<128x128xf32>
    %cst_23 = arith.constant 0.000000e+00 : f32
    %41 = vector.broadcast %cst_23 : f32 to vector<128x128xf32>
    %42 = arith.maximumf %40, %41 : vector<128x128xf32>
    %43 = arith.truncf %42 : vector<128x128xf32> to vector<128x128xbf16>
    %c3_24 = arith.constant 3 : index
    %c0_25 = arith.constant 0 : index
    %c0_26 = arith.constant 0 : index
    %44 = vector.load %arg3[%c3_24, %c0_25, %c0_26] : memref<4x128x128xbf16, #tpu.memory_space<vmem>>, vector<1x128x128xbf16>
    %45 = vector.shape_cast %44 : vector<1x128x128xbf16> to vector<128x128xbf16>
    %cst_27 = arith.constant dense<0.000000e+00> : vector<128x128xf32>
    %46 = tpu.matmul %43, %45, %cst_27 {dimension_numbers = #tpu.dot_dimension_numbers<[1], [0], [0], [1], [0, 0, 1, 1], [], []>} : vector<128x128xbf16>, vector<128x128xbf16>, vector<128x128xf32> -> vector<128x128xf32>
    %c4 = arith.constant 4 : index
    %c0_28 = arith.constant 0 : index
    %47 = vector.load %arg4[%c4, %c0_28] : memref<5x128xf32, #tpu.memory_space<vmem>>, vector<1x128xf32>
    %48 = vector.shape_cast %47 : vector<1x128xf32> to vector<128xf32>
    %49 = vector.shape_cast %48 : vector<128xf32> to vector<1x128xf32>
    %50 = vector.broadcast %49 : vector<1x128xf32> to vector<128x128xf32>
    %51 = arith.addf %46, %50 : vector<128x128xf32>
    %c0_29 = arith.constant 0 : index
    %c0_30 = arith.constant 0 : index
    %52 = vector.load %arg5[%c0_29, %c0_30] : memref<128x128xf32, #tpu.memory_space<vmem>>, vector<128x128xf32>
    tpu.vector_store %arg5[%c0_29, %c0_30], %51 {strides = array<i32>} : memref<128x128xf32, #tpu.memory_space<vmem>>, vector<128x128xf32>,
    return
  }
  func.func @transform_0(%arg0: i32) -> (i32, i32) {
    %c0_i32 = arith.constant 0 : i32
    %c0_i32_0 = arith.constant 0 : i32
    return %arg0, %c0_i32 : i32, i32
  }
  func.func @transform_1(%arg0: i32) -> (i32, i32) {
    %c0_i32 = arith.constant 0 : i32
    %c0_i32_0 = arith.constant 0 : i32
    %c0_i32_1 = arith.constant 0 : i32
    return %c0_i32, %c0_i32_0 : i32, i32
  }
  func.func @transform_2(%arg0: i32) -> (i32, i32, i32) {
    %c0_i32 = arith.constant 0 : i32
    %c0_i32_0 = arith.constant 0 : i32
    %c0_i32_1 = arith.constant 0 : i32
    %c0_i32_2 = arith.constant 0 : i32
    return %c0_i32, %c0_i32_0, %c0_i32_1 : i32, i32, i32
  }
  func.func @transform_3(%arg0: i32) -> (i32, i32) {
    %c0_i32 = arith.constant 0 : i32
    %c0_i32_0 = arith.constant 0 : i32
    %c0_i32_1 = arith.constant 0 : i32
    return %c0_i32, %c0_i32_0 : i32, i32
  }
  func.func @transform_4(%arg0: i32) -> (i32, i32) {
    %c0_i32 = arith.constant 0 : i32
    %c0_i32_0 = arith.constant 0 : i32
    return %arg0, %c0_i32 : i32, i32
  }
}

</mosaic_0001>

<llo_original>
// kernel: tpu_custom_call.1
$region0: #{tpu_custom_call.1}
  #allocation0 [shape = 'u32[]', space=smem, size = 0x4, offset = 0x4, fixed_abs, tag = 'smem constant byte address 0x4 - core index']
  #allocation1 [shape = 'u32[144,128]{1,0:T(1,128)}', space=vmem, size = 0x12000, scoped, tag = 'internal scratch']
  %s0 = inlined_call_operand.hbm [shape: bf16[128,128], index: 0, kind: input, shape index: {}]
  %s1 = inlined_call_operand.hbm [shape: bf16[128,128], index: 1, kind: input, shape index: {}]
  %s2 = inlined_call_operand.hbm [shape: bf16[4,128,128], index: 2, kind: input, shape index: {}]
  %s3 = inlined_call_operand.hbm [shape: f32[5,128], index: 3, kind: input, shape index: {}]
  %s4 = inlined_call_operand.hbm [shape: f32[128,128], index: 4, kind: output, shape index: {}]
  %s5 = sld [smem:[#allocation0]]
  $region42: #{tpu_custom_call.1} parent=0
    _
  %s7 = ssub.s32 1, %s5
  %s8 = scalar_select 0, %s7, %s5
  $region1: #{tpu_custom_call.1} parent=0
    #allocation2 [shape = 'u8[32768]{0}', space=vmem, size = 0x8000, scoped, tag = 'input window, operand 0, single buffered']
    #allocation3 [shape = 's32[1]{0}', space=sflag, size = 0x4, scoped, tag = 'scoped memory for tpu_custom_call.1']
    #allocation4 [shape = 's32[1]{0}', space=sflag, size = 0x4, scoped, tag = 'scoped memory for tpu_custom_call.1']
    #allocation5 [shape = 'u8[32768]{0}', space=vmem, size = 0x8000, scoped, tag = 'input window, operand 1, single buffered']
    #allocation6 [shape = 's32[1]{0}', space=sflag, size = 0x4, scoped, tag = 'scoped memory for tpu_custom_call.1']
    #allocation7 [shape = 'u8[131072]{0}', space=vmem, size = 0x20000, scoped, tag = 'input window, operand 2, single buffered']
    #allocation8 [shape = 'u8[4096]{0}', space=vmem, size = 0x1000, scoped, tag = 'input window, operand 3, single buffered']
    #allocation9 [shape = 's32[1]{0}', space=sflag, size = 0x4, scoped, tag = 'scoped memory for tpu_custom_call.1']
    #allocation10 [shape = 'u8[65536]{0}', space=vmem, size = 0x10000, scoped, tag = 'output window, operand 0, single buffered']
    %9 = vsyncpa [#allocation3], 0
    %10 = vsyncpa [#allocation6], 0
    %11 = vsyncpa [#allocation9], 0
    %12 = vsyncpa [#allocation4], 0
    // Predicated region
    $region2: #{tpu_custom_call.1} parent=1 // pred_check
      _
    $region3: #{tpu_custom_call.1} parent=1 // pred_check_branch
      %14 = sbr.rel (0) target = $region5
    $region4: #{tpu_custom_call.1} parent=1 // pred_region
      %s16 = ssub.s32 1024, 1024
      %17 = vsyncadd [#allocation3], %s16
      %s18 = sshll.u32 [#allocation2], 4
      %s19 = int_to_ptr.vmem [resolvable:$true] %s18
      %24 = dma.hbm_to_vmem [thread:$0]  %s0, 1024, %s19, [#allocation3], 64, 64, 4
    $region5: #{tpu_custom_call.1} parent=1 // pred_fallthru
      _
    // Predicated region
    $region6: #{tpu_custom_call.1} parent=1 // pred_check
      _
    $region7: #{tpu_custom_call.1} parent=1 // pred_check_branch
      %26 = sbr.rel (0) target = $region9
    $region8: #{tpu_custom_call.1} parent=1 // pred_region
      %s28 = ssub.s32 1024, 1024
      %29 = vsyncadd [#allocation6], %s28
      %s30 = sshll.u32 [#allocation5], 4
      %s31 = int_to_ptr.vmem [resolvable:$true] %s30
      %36 = dma.hbm_to_vmem [thread:$0]  %s1, 1024, %s31, [#allocation6], 64, 64, 4
    $region9: #{tpu_custom_call.1} parent=1 // pred_fallthru
      _
    // Predicated region
    $region10: #{tpu_custom_call.1} parent=1 // pred_check
      _
    $region11: #{tpu_custom_call.1} parent=1 // pred_check_branch
      %38 = sbr.rel (0) target = $region13
    $region12: #{tpu_custom_call.1} parent=1 // pred_region
      %s40 = ssub.s32 4096, 4096
      %41 = vsyncadd [#allocation6], %s40
      %s42 = sshll.u32 [#allocation7], 4
      %s43 = int_to_ptr.vmem [resolvable:$true] %s42
      %48 = dma.hbm_to_vmem [thread:$0]  %s2, 4096, %s43, [#allocation6], 64, 64, 4
    $region13: #{tpu_custom_call.1} parent=1 // pred_fallthru
      _
    // Predicated region
    $region14: #{tpu_custom_call.1} parent=1 // pred_check
      _
    $region15: #{tpu_custom_call.1} parent=1 // pred_check_branch
      %50 = sbr.rel (0) target = $region17
    $region16: #{tpu_custom_call.1} parent=1 // pred_region
      %s52 = ssub.s32 128, 128
      %53 = vsyncadd [#allocation9], %s52
      %s55 = sshll.u32 [#allocation8], 4
      %s56 = int_to_ptr.vmem [resolvable:$true] %s55
      %58 = dma.hbm_to_vmem [thread:$0]  %s3, 128, %s56, [#allocation9]
    $region17: #{tpu_custom_call.1} parent=1 // pred_fallthru
      _
    // Predicated region
    $region18: #{tpu_custom_call.1} parent=1 // pred_check
      _
    $region19: #{tpu_custom_call.1} parent=1 // pred_check_branch
      %60 = sbr.rel (0) target = $region21
    $region20: #{tpu_custom_call.1} parent=1 // pred_region
      %61 = dma.done [#allocation3], 1024
    $region21: #{tpu_custom_call.1} parent=1 // pred_fallthru
      _
    // Predicated region
    $region22: #{tpu_custom_call.1} parent=1 // pred_check
      _
    $region23: #{tpu_custom_call.1} parent=1 // pred_check_branch
      %63 = sbr.rel (0) target = $region25
    $region24: #{tpu_custom_call.1} parent=1 // pred_region
      %64 = dma.done [#allocation6], 1024
    $region25: #{tpu_custom_call.1} parent=1 // pred_fallthru
      _
    // Predicated region
    $region26: #{tpu_custom_call.1} parent=1 // pred_check
      _
    $region27: #{tpu_custom_call.1} parent=1 // pred_check_branch
      %66 = sbr.rel (0) target = $region29
    $region28: #{tpu_custom_call.1} parent=1 // pred_region
      %67 = dma.done [#allocation6], 4096
    $region29: #{tpu_custom_call.1} parent=1 // pred_fallthru
      _
    // Predicated region
    $region30: #{tpu_custom_call.1} parent=1 // pred_check
      _
    $region31: #{tpu_custom_call.1} parent=1 // pred_check_branch
      %69 = sbr.rel (0) target = $region33
    $region32: #{tpu_custom_call.1} parent=1 // pred_region
      %70 = dma.done [#allocation9], 128
    $region33: #{tpu_custom_call.1} parent=1 // pred_fallthru
      _
    %v72 = vld [vmem:[#allocation2] sm:$0xf]
    %v73 = vld [vmem:[#allocation2 + $0x4] sm:$0xf]
    %v74 = vld [vmem:[#allocation2 + $0x8] sm:$0xf]
    %v75 = vld [vmem:[#allocation2 + $0xc] sm:$0xf]
    %v76 = vld [vmem:[#allocation2 + $0x10] sm:$0xf]
    %v77 = vld [vmem:[#allocation2 + $0x14] sm:$0xf]
    %v78 = vld [vmem:[#allocation2 + $0x18] sm:$0xf]
    %v79 = vld [vmem:[#allocation2 + $0x1c] sm:$0xf]
    %v80 = vld [vmem:[#allocation2 + $0x20] sm:$0xf]
    %v81 = vld [vmem:[#allocation2 + $0x24] sm:$0xf]
    %v82 = vld [vmem:[#allocation2 + $0x28] sm:$0xf]
    %v83 = vld [vmem:[#allocation2 + $0x2c] sm:$0xf]
    %v84 = vld [vmem:[#allocation2 + $0x30] sm:$0xf]
    %v85 = vld [vmem:[#allocation2 + $0x34] sm:$0xf]
    %v86 = vld [vmem:[#allocation2 + $0x38] sm:$0xf]
    %v87 = vld [vmem:[#allocation2 + $0x3c] sm:$0xf]
    %v88 = vld [vmem:[#allocation5] sm:$0xf]
    %v89 = vld [vmem:[#allocation5 + $0x4] sm:$0xf]
    %v90 = vld [vmem:[#allocation5 + $0x8] sm:$0xf]
    %v91 = vld [vmem:[#allocation5 + $0xc] sm:$0xf]
    %v92 = vld [vmem:[#allocation5 + $0x10] sm:$0xf]
    %v93 = vld [vmem:[#allocation5 + $0x14] sm:$0xf]
    %v94 = vld [vmem:[#allocation5 + $0x18] sm:$0xf]
    %v95 = vld [vmem:[#allocation5 + $0x1c] sm:$0xf]
    %v96 = vld [vmem:[#allocation5 + $0x20] sm:$0xf]
    %v97 = vld [vmem:[#allocation5 + $0x24] sm:$0xf]
    %v98 = vld [vmem:[#allocation5 + $0x28] sm:$0xf]
    %v99 = vld [vmem:[#allocation5 + $0x2c] sm:$0xf]
    %v100 = vld [vmem:[#allocation5 + $0x30] sm:$0xf]
    %v101 = vld [vmem:[#allocation5 + $0x34] sm:$0xf]
    %v102 = vld [vmem:[#allocation5 + $0x38] sm:$0xf]
    %v103 = vld [vmem:[#allocation5 + $0x3c] sm:$0xf]
    %v104 = vld [vmem:[#allocation8] sm:$0x1]
    %v105 = vlaneseq
    %v106 = vshrl.u32 %v105, 7
    %v107 = vsub.s32 0, %v106
    %v108 = vrot.slane %v104, %v107
    %v125 = vunpack.c.l.b16 %v72
    %v126 = vunpack.c.l.b16 %v73
    %v127 = vunpack.c.l.b16 %v74
    %v128 = vunpack.c.l.b16 %v75
    %v129 = vunpack.c.l.b16 %v76
    %v130 = vunpack.c.l.b16 %v77
    %v131 = vunpack.c.l.b16 %v78
    %v132 = vunpack.c.l.b16 %v79
    %v133 = vunpack.c.l.b16 %v80
    %v134 = vunpack.c.l.b16 %v81
    %v135 = vunpack.c.l.b16 %v82
    %v136 = vunpack.c.l.b16 %v83
    %v137 = vunpack.c.l.b16 %v84
    %v138 = vunpack.c.l.b16 %v85
    %v139 = vunpack.c.l.b16 %v86
    %v140 = vunpack.c.l.b16 %v87
    %v141 = vpack.c.b16 %v126, %v125
    %v142 = vpack.c.b16 %v128, %v127
    %v143 = vpack.c.b16 %v130, %v129
    %v144 = vpack.c.b16 %v132, %v131
    %v145 = vpack.c.b16 %v134, %v133
    %v146 = vpack.c.b16 %v136, %v135
    %v147 = vpack.c.b16 %v138, %v137
    %v148 = vpack.c.b16 %v140, %v139
    %v173 = vunpack.c.l.b16 %v88
    %v174 = vunpack.c.l.b16 %v89
    %v175 = vunpack.c.l.b16 %v90
    %v176 = vunpack.c.l.b16 %v91
    %v177 = vunpack.c.l.b16 %v92
    %v178 = vunpack.c.l.b16 %v93
    %v179 = vunpack.c.l.b16 %v94
    %v180 = vunpack.c.l.b16 %v95
    %v181 = vunpack.c.l.b16 %v96
    %v182 = vunpack.c.l.b16 %v97
    %v183 = vunpack.c.l.b16 %v98
    %v184 = vunpack.c.l.b16 %v99
    %v185 = vunpack.c.l.b16 %v100
    %v186 = vunpack.c.l.b16 %v101
    %v187 = vunpack.c.l.b16 %v102
    %v188 = vunpack.c.l.b16 %v103
    %v189 = vpack.c.b16 %v174, %v173
    %v190 = vpack.c.b16 %v176, %v175
    %v191 = vpack.c.b16 %v178, %v177
    %v192 = vpack.c.b16 %v180, %v179
    %v193 = vpack.c.b16 %v182, %v181
    %v194 = vpack.c.b16 %v184, %v183
    %v195 = vpack.c.b16 %v186, %v185
    %v196 = vpack.c.b16 %v188, %v187
    %205 = vmatprep.subr.bf16.mxu0 0
    %206 = vmatpush1.bf16.msra.mxu0 %v196
    %207 = vmatprep.subr.bf16.mxu0 0
    %208 = vmatpush1.bf16.msra.mxu0 %v195
    %209 = vmatprep.subr.bf16.mxu0 0
    %210 = vmatpush1.bf16.msra.mxu0 %v194
    %211 = vmatprep.subr.bf16.mxu0 0
    %212 = vmatpush1.bf16.msra.mxu0 %v193
    %213 = vmatprep.subr.bf16.mxu0 0
    %214 = vmatpush1.bf16.msra.mxu0 %v192
    %215 = vmatprep.subr.bf16.mxu0 0
    %216 = vmatpush1.bf16.msra.mxu0 %v191
    %217 = vmatprep.subr.bf16.mxu0 0
    %218 = vmatpush1.bf16.msra.mxu0 %v190
    %219 = vmatprep.subr.bf16.mxu0 0
    %220 = vmatpush1.bf16.msra.mxu0 %v189
    %221 = vmatprep.subr.bf16.mxu0 0
    %222 = vmatpush2.bf16.msra.mxu0 0
    %223 = vmatprep.subr.bf16.mxu0 0
    %224 = vmatpush2.bf16.msra.mxu0 0
    %225 = vmatprep.subr.bf16.mxu0 0
    %226 = vmatpush2.bf16.msra.mxu0 0
    %227 = vmatprep.subr.bf16.mxu0 0
    %228 = vmatpush2.bf16.msra.mxu0 0
    %229 = vmatprep.subr.bf16.mxu0 0
    %230 = vmatpush2.bf16.msra.mxu0 0
    %231 = vmatprep.subr.bf16.mxu0 0
    %232 = vmatpush2.bf16.msra.mxu0 0
    %233 = vmatprep.subr.bf16.mxu0 0
    %234 = vmatpush2.bf16.msra.mxu0 0
    %235 = vmatprep.subr.bf16.mxu0 0
    %236 = vmatpush2.bf16.msra.mxu0 0
    %237 = vmatprep.mubr.bf16.mxu0 0
    %238 = vmatmul.mubr.bf16.gmra.mxu0 %v141
    %v239 = vpop.f32.mrf.mxu0
    %v240 = vadd.f32 %v108, %v239
    %v241 = vpop.f32.mrf.mxu0
    %v242 = vpop.f32.mrf.mxu0
    %v243 = vadd.f32 %v108, %v242
    %v244 = vpop.f32.mrf.mxu0
    %245 = vmatprep.mubr.bf16.mxu0 0
    %246 = vmatmul.mubr.bf16.gmra.mxu0 %v142
    %v247 = vpop.f32.mrf.mxu0
    %v248 = vadd.f32 %v108, %v247
    %v249 = vpop.f32.mrf.mxu0
    %v250 = vpop.f32.mrf.mxu0
    %v251 = vadd.f32 %v108, %v250
    %v252 = vpop.f32.mrf.mxu0
    %253 = vmatprep.mubr.bf16.mxu0 0
    %254 = vmatmul.mubr.bf16.gmra.mxu0 %v143
    %v255 = vpop.f32.mrf.mxu0
    %v256 = vadd.f32 %v108, %v255
    %v257 = vpop.f32.mrf.mxu0
    %v258 = vpop.f32.mrf.mxu0
    %v259 = vadd.f32 %v108, %v258
    %v260 = vpop.f32.mrf.mxu0
    %261 = vmatprep.mubr.bf16.mxu0 0
    %262 = vmatmul.mubr.bf16.gmra.mxu0 %v144
    %v263 = vpop.f32.mrf.mxu0
    %v264 = vadd.f32 %v108, %v263
    %v265 = vpop.f32.mrf.mxu0
    %v266 = vpop.f32.mrf.mxu0
    %v267 = vadd.f32 %v108, %v266
    %v268 = vpop.f32.mrf.mxu0
    %269 = vmatprep.mubr.bf16.mxu0 0
    %270 = vmatmul.mubr.bf16.gmra.mxu0 %v145
    %v271 = vpop.f32.mrf.mxu0
    %v272 = vadd.f32 %v108, %v271
    %v273 = vpop.f32.mrf.mxu0
    %v274 = vpop.f32.mrf.mxu0
    %v275 = vadd.f32 %v108, %v274
    %v276 = vpop.f32.mrf.mxu0
    %277 = vmatprep.mubr.bf16.mxu0 0
    %278 = vmatmul.mubr.bf16.gmra.mxu0 %v146
    %v279 = vpop.f32.mrf.mxu0
    %v280 = vadd.f32 %v108, %v279
    %v281 = vpop.f32.mrf.mxu0
    %v282 = vpop.f32.mrf.mxu0
    %v283 = vadd.f32 %v108, %v282
    %v284 = vpop.f32.mrf.mxu0
    %285 = vmatprep.mubr.bf16.mxu0 0
    %286 = vmatmul.mubr.bf16.gmra.mxu0 %v147
    %v287 = vpop.f32.mrf.mxu0
    %v288 = vadd.f32 %v108, %v287
    %v289 = vpop.f32.mrf.mxu0
    %v290 = vpop.f32.mrf.mxu0
    %v291 = vadd.f32 %v108, %v290
    %v292 = vpop.f32.mrf.mxu0
    %293 = vmatprep.mubr.bf16.mxu0 0
    %294 = vmatmul.mubr.bf16.gmra.mxu0 %v148
    %v295 = vpop.f32.mrf.mxu0
    %v296 = vadd.f32 %v108, %v295
    %v297 = vpop.f32.mrf.mxu0
    %v298 = vpop.f32.mrf.mxu0
    %v299 = vadd.f32 %v108, %v298
    %v300 = vpop.f32.mrf.mxu0
    %301 = vdwg.mxu0
    %v302 = vmax.f32 %v240, 0.0
    %v303 = vmax.f32 %v243, 0.0
    %v304 = vmax.f32 %v248, 0.0
    %v305 = vmax.f32 %v251, 0.0
    %v306 = vmax.f32 %v256, 0.0
    %v307 = vmax.f32 %v259, 0.0
    %v308 = vmax.f32 %v264, 0.0
    %v309 = vmax.f32 %v267, 0.0
    %v310 = vmax.f32 %v272, 0.0
    %v311 = vmax.f32 %v275, 0.0
    %v312 = vmax.f32 %v280, 0.0
    %v313 = vmax.f32 %v283, 0.0
    %v314 = vmax.f32 %v288, 0.0
    %v315 = vmax.f32 %v291, 0.0
    %v316 = vmax.f32 %v296, 0.0
    %v317 = vmax.f32 %v299, 0.0
    %v318 = vpack.c.bf16 %v303, %v302
    %v319 = vpack.c.bf16 %v305, %v304
    %v320 = vpack.c.bf16 %v307, %v306
    %v321 = vpack.c.bf16 %v309, %v308
    %v322 = vpack.c.bf16 %v311, %v310
    %v323 = vpack.c.bf16 %v313, %v312
    %v324 = vpack.c.bf16 %v315, %v314
    %v325 = vpack.c.bf16 %v317, %v316
    %v326 = vld [vmem:[#allocation7] sm:$0xf]
    %v327 = vld [vmem:[#allocation7 + $0x4] sm:$0xf]
    %v328 = vld [vmem:[#allocation7 + $0x8] sm:$0xf]
    %v329 = vld [vmem:[#allocation7 + $0xc] sm:$0xf]
    %v330 = vld [vmem:[#allocation7 + $0x10] sm:$0xf]
    %v331 = vld [vmem:[#allocation7 + $0x14] sm:$0xf]
    %v332 = vld [vmem:[#allocation7 + $0x18] sm:$0xf]
    %v333 = vld [vmem:[#allocation7 + $0x1c] sm:$0xf]
    %v334 = vld [vmem:[#allocation7 + $0x20] sm:$0xf]
    %v335 = vld [vmem:[#allocation7 + $0x24] sm:$0xf]
    %v336 = vld [vmem:[#allocation7 + $0x28] sm:$0xf]
    %v337 = vld [vmem:[#allocation7 + $0x2c] sm:$0xf]
    %v338 = vld [vmem:[#allocation7 + $0x30] sm:$0xf]
    %v339 = vld [vmem:[#allocation7 + $0x34] sm:$0xf]
    %v340 = vld [vmem:[#allocation7 + $0x38] sm:$0xf]
    %v341 = vld [vmem:[#allocation7 + $0x3c] sm:$0xf]
    %v342 = vld [vmem:[#allocation8 + $0x1] sm:$0x1]
    %v343 = vlaneseq
    %v344 = vshrl.u32 %v343, 7
    %v345 = vsub.s32 0, %v344
    %v346 = vrot.slane %v342, %v345
    %v363 = vunpack.c.l.b16 %v326
    %v364 = vunpack.c.l.b16 %v327
    %v365 = vunpack.c.l.b16 %v328
    %v366 = vunpack.c.l.b16 %v329
    %v367 = vunpack.c.l.b16 %v330
    %v368 = vunpack.c.l.b16 %v331
    %v369 = vunpack.c.l.b16 %v332
    %v370 = vunpack.c.l.b16 %v333
    %v371 = vunpack.c.l.b16 %v334
    %v372 = vunpack.c.l.b16 %v335
    %v373 = vunpack.c.l.b16 %v336
    %v374 = vunpack.c.l.b16 %v337
    %v375 = vunpack.c.l.b16 %v338
    %v376 = vunpack.c.l.b16 %v339
    %v377 = vunpack.c.l.b16 %v340
    %v378 = vunpack.c.l.b16 %v341
    %v379 = vpack.c.b16 %v364, %v363
    %v380 = vpack.c.b16 %v366, %v365
    %v381 = vpack.c.b16 %v368, %v367
    %v382 = vpack.c.b16 %v370, %v369
    %v383 = vpack.c.b16 %v372, %v371
    %v384 = vpack.c.b16 %v374, %v373
    %v385 = vpack.c.b16 %v376, %v375
    %v386 = vpack.c.b16 %v378, %v377
    %395 = vmatprep.subr.bf16.mxu0 0
    %396 = vmatpush1.bf16.msra.mxu0 %v386
    %397 = vmatprep.subr.bf16.mxu0 0
    %398 = vmatpush1.bf16.msra.mxu0 %v385
    %399 = vmatprep.subr.bf16.mxu0 0
    %400 = vmatpush1.bf16.msra.mxu0 %v384
    %401 = vmatprep.subr.bf16.mxu0 0
    %402 = vmatpush1.bf16.msra.mxu0 %v383
    %403 = vmatprep.subr.bf16.mxu0 0
    %404 = vmatpush1.bf16.msra.mxu0 %v382
    %405 = vmatprep.subr.bf16.mxu0 0
    %406 = vmatpush1.bf16.msra.mxu0 %v381
    %407 = vmatprep.subr.bf16.mxu0 0
    %408 = vmatpush1.bf16.msra.mxu0 %v380
    %409 = vmatprep.subr.bf16.mxu0 0
    %410 = vmatpush1.bf16.msra.mxu0 %v379
    %411 = vmatprep.subr.bf16.mxu0 0
    %412 = vmatpush2.bf16.msra.mxu0 0
    %413 = vmatprep.subr.bf16.mxu0 0
    %414 = vmatpush2.bf16.msra.mxu0 0
    %415 = vmatprep.subr.bf16.mxu0 0
    %416 = vmatpush2.bf16.msra.mxu0 0
    %417 = vmatprep.subr.bf16.mxu0 0
    %418 = vmatpush2.bf16.msra.mxu0 0
    %419 = vmatprep.subr.bf16.mxu0 0
    %420 = vmatpush2.bf16.msra.mxu0 0
    %421 = vmatprep.subr.bf16.mxu0 0
    %422 = vmatpush2.bf16.msra.mxu0 0
    %423 = vmatprep.subr.bf16.mxu0 0
    %424 = vmatpush2.bf16.msra.mxu0 0
    %425 = vmatprep.subr.bf16.mxu0 0
    %426 = vmatpush2.bf16.msra.mxu0 0
    %427 = vmatprep.mubr.bf16.mxu0 0
    %428 = vmatmul.mubr.bf16.gmra.mxu0 %v318
    %v429 = vpop.f32.mrf.mxu0
    %v430 = vadd.f32 %v346, %v429
    %v431 = vpop.f32.mrf.mxu0
    %v432 = vpop.f32.mrf.mxu0
    %v433 = vadd.f32 %v346, %v432
    %v434 = vpop.f32.mrf.mxu0
    %435 = vmatprep.mubr.bf16.mxu0 0
    %436 = vmatmul.mubr.bf16.gmra.mxu0 %v319
    %v437 = vpop.f32.mrf.mxu0
    %v438 = vadd.f32 %v346, %v437
    %v439 = vpop.f32.mrf.mxu0
    %v440 = vpop.f32.mrf.mxu0
    %v441 = vadd.f32 %v346, %v440
    %v442 = vpop.f32.mrf.mxu0
    %443 = vmatprep.mubr.bf16.mxu0 0
    %444 = vmatmul.mubr.bf16.gmra.mxu0 %v320
    %v445 = vpop.f32.mrf.mxu0
    %v446 = vadd.f32 %v346, %v445
    %v447 = vpop.f32.mrf.mxu0
    %v448 = vpop.f32.mrf.mxu0
    %v449 = vadd.f32 %v346, %v448
    %v450 = vpop.f32.mrf.mxu0
    %451 = vmatprep.mubr.bf16.mxu0 0
    %452 = vmatmul.mubr.bf16.gmra.mxu0 %v321
    %v453 = vpop.f32.mrf.mxu0
    %v454 = vadd.f32 %v346, %v453
    %v455 = vpop.f32.mrf.mxu0
    %v456 = vpop.f32.mrf.mxu0
    %v457 = vadd.f32 %v346, %v456
    %v458 = vpop.f32.mrf.mxu0
    %459 = vmatprep.mubr.bf16.mxu0 0
    %460 = vmatmul.mubr.bf16.gmra.mxu0 %v322
    %v461 = vpop.f32.mrf.mxu0
    %v462 = vadd.f32 %v346, %v461
    %v463 = vpop.f32.mrf.mxu0
    %v464 = vpop.f32.mrf.mxu0
    %v465 = vadd.f32 %v346, %v464
    %v466 = vpop.f32.mrf.mxu0
    %467 = vmatprep.mubr.bf16.mxu0 0
    %468 = vmatmul.mubr.bf16.gmra.mxu0 %v323
    %v469 = vpop.f32.mrf.mxu0
    %v470 = vadd.f32 %v346, %v469
    %v471 = vpop.f32.mrf.mxu0
    %v472 = vpop.f32.mrf.mxu0
    %v473 = vadd.f32 %v346, %v472
    %v474 = vpop.f32.mrf.mxu0
    %475 = vmatprep.mubr.bf16.mxu0 0
    %476 = vmatmul.mubr.bf16.gmra.mxu0 %v324
    %v477 = vpop.f32.mrf.mxu0
    %v478 = vadd.f32 %v346, %v477
    %v479 = vpop.f32.mrf.mxu0
    %v480 = vpop.f32.mrf.mxu0
    %v481 = vadd.f32 %v346, %v480
    %v482 = vpop.f32.mrf.mxu0
    %483 = vmatprep.mubr.bf16.mxu0 0
    %484 = vmatmul.mubr.bf16.gmra.mxu0 %v325
    %v485 = vpop.f32.mrf.mxu0
    %v486 = vadd.f32 %v346, %v485
    %v487 = vpop.f32.mrf.mxu0
    %v488 = vpop.f32.mrf.mxu0
    %v489 = vadd.f32 %v346, %v488
    %v490 = vpop.f32.mrf.mxu0
    %491 = vdwg.mxu0
    %v492 = vmax.f32 %v430, 0.0
    %v493 = vmax.f32 %v433, 0.0
    %v494 = vmax.f32 %v438, 0.0
    %v495 = vmax.f32 %v441, 0.0
    %v496 = vmax.f32 %v446, 0.0
    %v497 = vmax.f32 %v449, 0.0
    %v498 = vmax.f32 %v454, 0.0
    %v499 = vmax.f32 %v457, 0.0
    %v500 = vmax.f32 %v462, 0.0
    %v501 = vmax.f32 %v465, 0.0
    %v502 = vmax.f32 %v470, 0.0
    %v503 = vmax.f32 %v473, 0.0
    %v504 = vmax.f32 %v478, 0.0
    %v505 = vmax.f32 %v481, 0.0
    %v506 = vmax.f32 %v486, 0.0
    %v507 = vmax.f32 %v489, 0.0
    %v508 = vpack.c.bf16 %v493, %v492
    %v509 = vpack.c.bf16 %v495, %v494
    %v510 = vpack.c.bf16 %v497, %v496
    %v511 = vpack.c.bf16 %v499, %v498
    %v512 = vpack.c.bf16 %v501, %v500
    %v513 = vpack.c.bf16 %v503, %v502
    %v514 = vpack.c.bf16 %v505, %v504
    %v515 = vpack.c.bf16 %v507, %v506
    %s516 = scalar_lea.vmem [#allocation7], 64
    %v517 = vld [vmem:[%s516] sm:$0xf]
    %v518 = vld [vmem:[%s516 + $0x4] sm:$0xf]
    %v519 = vld [vmem:[%s516 + $0x8] sm:$0xf]
    %v520 = vld [vmem:[%s516 + $0xc] sm:$0xf]
    %v521 = vld [vmem:[%s516 + $0x10] sm:$0xf]
    %v522 = vld [vmem:[%s516 + $0x14] sm:$0xf]
    %v523 = vld [vmem:[%s516 + $0x18] sm:$0xf]
    %v524 = vld [vmem:[%s516 + $0x1c] sm:$0xf]
    %v525 = vld [vmem:[%s516 + $0x20] sm:$0xf]
    %v526 = vld [vmem:[%s516 + $0x24] sm:$0xf]
    %v527 = vld [vmem:[%s516 + $0x28] sm:$0xf]
    %v528 = vld [vmem:[%s516 + $0x2c] sm:$0xf]
    %v529 = vld [vmem:[%s516 + $0x30] sm:$0xf]
    %v530 = vld [vmem:[%s516 + $0x34] sm:$0xf]
    %v531 = vld [vmem:[%s516 + $0x38] sm:$0xf]
    %v532 = vld [vmem:[%s516 + $0x3c] sm:$0xf]
    %v533 = vld [vmem:[#allocation8 + $0x2] sm:$0x1]
    %v534 = vlaneseq
    %v535 = vshrl.u32 %v534, 7
    %v536 = vsub.s32 0, %v535
    %v537 = vrot.slane %v533, %v536
    %v554 = vunpack.c.l.b16 %v517
    %v555 = vunpack.c.l.b16 %v518
    %v556 = vunpack.c.l.b16 %v519
    %v557 = vunpack.c.l.b16 %v520
    %v558 = vunpack.c.l.b16 %v521
    %v559 = vunpack.c.l.b16 %v522
    %v560 = vunpack.c.l.b16 %v523
    %v561 = vunpack.c.l.b16 %v524
    %v562 = vunpack.c.l.b16 %v525
    %v563 = vunpack.c.l.b16 %v526
    %v564 = vunpack.c.l.b16 %v527
    %v565 = vunpack.c.l.b16 %v528
    %v566 = vunpack.c.l.b16 %v529
    %v567 = vunpack.c.l.b16 %v530
    %v568 = vunpack.c.l.b16 %v531
    %v569 = vunpack.c.l.b16 %v532
    %v570 = vpack.c.b16 %v555, %v554
    %v571 = vpack.c.b16 %v557, %v556
    %v572 = vpack.c.b16 %v559, %v558
    %v573 = vpack.c.b16 %v561, %v560
    %v574 = vpack.c.b16 %v563, %v562
    %v575 = vpack.c.b16 %v565, %v564
    %v576 = vpack.c.b16 %v567, %v566
    %v577 = vpack.c.b16 %v569, %v568
    %586 = vmatprep.subr.bf16.mxu0 0
    %587 = vmatpush1.bf16.msra.mxu0 %v577
    %588 = vmatprep.subr.bf16.mxu0 0
    %589 = vmatpush1.bf16.msra.mxu0 %v576
    %590 = vmatprep.subr.bf16.mxu0 0
    %591 = vmatpush1.bf16.msra.mxu0 %v575
    %592 = vmatprep.subr.bf16.mxu0 0
    %593 = vmatpush1.bf16.msra.mxu0 %v574
    %594 = vmatprep.subr.bf16.mxu0 0
    %595 = vmatpush1.bf16.msra.mxu0 %v573
    %596 = vmatprep.subr.bf16.mxu0 0
    %597 = vmatpush1.bf16.msra.mxu0 %v572
    %598 = vmatprep.subr.bf16.mxu0 0
    %599 = vmatpush1.bf16.msra.mxu0 %v571
    %600 = vmatprep.subr.bf16.mxu0 0
    %601 = vmatpush1.bf16.msra.mxu0 %v570
    %602 = vmatprep.subr.bf16.mxu0 0
    %603 = vmatpush2.bf16.msra.mxu0 0
    %604 = vmatprep.subr.bf16.mxu0 0
    %605 = vmatpush2.bf16.msra.mxu0 0
    %606 = vmatprep.subr.bf16.mxu0 0
    %607 = vmatpush2.bf16.msra.mxu0 0
    %608 = vmatprep.subr.bf16.mxu0 0
    %609 = vmatpush2.bf16.msra.mxu0 0
    %610 = vmatprep.subr.bf16.mxu0 0
    %611 = vmatpush2.bf16.msra.mxu0 0
    %612 = vmatprep.subr.bf16.mxu0 0
    %613 = vmatpush2.bf16.msra.mxu0 0
    %614 = vmatprep.subr.bf16.mxu0 0
    %615 = vmatpush2.bf16.msra.mxu0 0
    %616 = vmatprep.subr.bf16.mxu0 0
    %617 = vmatpush2.bf16.msra.mxu0 0
    %618 = vmatprep.mubr.bf16.mxu0 0
    %619 = vmatmul.mubr.bf16.gmra.mxu0 %v508
    %v620 = vpop.f32.mrf.mxu0
    %v621 = vadd.f32 %v537, %v620
    %v622 = vpop.f32.mrf.mxu0
    %v623 = vpop.f32.mrf.mxu0
    %v624 = vadd.f32 %v537, %v623
    %v625 = vpop.f32.mrf.mxu0
    %626 = vmatprep.mubr.bf16.mxu0 0
    %627 = vmatmul.mubr.bf16.gmra.mxu0 %v509
    %v628 = vpop.f32.mrf.mxu0
    %v629 = vadd.f32 %v537, %v628
    %v630 = vpop.f32.mrf.mxu0
    %v631 = vpop.f32.mrf.mxu0
    %v632 = vadd.f32 %v537, %v631
    %v633 = vpop.f32.mrf.mxu0
    %634 = vmatprep.mubr.bf16.mxu0 0
    %635 = vmatmul.mubr.bf16.gmra.mxu0 %v510
    %v636 = vpop.f32.mrf.mxu0
    %v637 = vadd.f32 %v537, %v636
    %v638 = vpop.f32.mrf.mxu0
    %v639 = vpop.f32.mrf.mxu0
    %v640 = vadd.f32 %v537, %v639
    %v641 = vpop.f32.mrf.mxu0
    %642 = vmatprep.mubr.bf16.mxu0 0
    %643 = vmatmul.mubr.bf16.gmra.mxu0 %v511
    %v644 = vpop.f32.mrf.mxu0
    %v645 = vadd.f32 %v537, %v644
    %v646 = vpop.f32.mrf.mxu0
    %v647 = vpop.f32.mrf.mxu0
    %v648 = vadd.f32 %v537, %v647
    %v649 = vpop.f32.mrf.mxu0
    %650 = vmatprep.mubr.bf16.mxu0 0
    %651 = vmatmul.mubr.bf16.gmra.mxu0 %v512
    %v652 = vpop.f32.mrf.mxu0
    %v653 = vadd.f32 %v537, %v652
    %v654 = vpop.f32.mrf.mxu0
    %v655 = vpop.f32.mrf.mxu0
    %v656 = vadd.f32 %v537, %v655
    %v657 = vpop.f32.mrf.mxu0
    %658 = vmatprep.mubr.bf16.mxu0 0
    %659 = vmatmul.mubr.bf16.gmra.mxu0 %v513
    %v660 = vpop.f32.mrf.mxu0
    %v661 = vadd.f32 %v537, %v660
    %v662 = vpop.f32.mrf.mxu0
    %v663 = vpop.f32.mrf.mxu0
    %v664 = vadd.f32 %v537, %v663
    %v665 = vpop.f32.mrf.mxu0
    %666 = vmatprep.mubr.bf16.mxu0 0
    %667 = vmatmul.mubr.bf16.gmra.mxu0 %v514
    %v668 = vpop.f32.mrf.mxu0
    %v669 = vadd.f32 %v537, %v668
    %v670 = vpop.f32.mrf.mxu0
    %v671 = vpop.f32.mrf.mxu0
    %v672 = vadd.f32 %v537, %v671
    %v673 = vpop.f32.mrf.mxu0
    %674 = vmatprep.mubr.bf16.mxu0 0
    %675 = vmatmul.mubr.bf16.gmra.mxu0 %v515
    %v676 = vpop.f32.mrf.mxu0
    %v677 = vadd.f32 %v537, %v676
    %v678 = vpop.f32.mrf.mxu0
    %v679 = vpop.f32.mrf.mxu0
    %v680 = vadd.f32 %v537, %v679
    %v681 = vpop.f32.mrf.mxu0
    %682 = vdwg.mxu0
    %v683 = vmax.f32 %v621, 0.0
    %v684 = vmax.f32 %v624, 0.0
    %v685 = vmax.f32 %v629, 0.0
    %v686 = vmax.f32 %v632, 0.0
    %v687 = vmax.f32 %v637, 0.0
    %v688 = vmax.f32 %v640, 0.0
    %v689 = vmax.f32 %v645, 0.0
    %v690 = vmax.f32 %v648, 0.0
    %v691 = vmax.f32 %v653, 0.0
    %v692 = vmax.f32 %v656, 0.0
    %v693 = vmax.f32 %v661, 0.0
    %v694 = vmax.f32 %v664, 0.0
    %v695 = vmax.f32 %v669, 0.0
    %v696 = vmax.f32 %v672, 0.0
    %v697 = vmax.f32 %v677, 0.0
    %v698 = vmax.f32 %v680, 0.0
    %v699 = vpack.c.bf16 %v684, %v683
    %v700 = vpack.c.bf16 %v686, %v685
    %v701 = vpack.c.bf16 %v688, %v687
    %v702 = vpack.c.bf16 %v690, %v689
    %v703 = vpack.c.bf16 %v692, %v691
    %v704 = vpack.c.bf16 %v694, %v693
    %v705 = vpack.c.bf16 %v696, %v695
    %v706 = vpack.c.bf16 %v698, %v697
    %s707 = scalar_lea.vmem [#allocation7], 128
    %v708 = vld [vmem:[%s707] sm:$0xf]
    %v709 = vld [vmem:[%s707 + $0x4] sm:$0xf]
    %v710 = vld [vmem:[%s707 + $0x8] sm:$0xf]
    %v711 = vld [vmem:[%s707 + $0xc] sm:$0xf]
    %v712 = vld [vmem:[%s707 + $0x10] sm:$0xf]
    %v713 = vld [vmem:[%s707 + $0x14] sm:$0xf]
    %v714 = vld [vmem:[%s707 + $0x18] sm:$0xf]
    %v715 = vld [vmem:[%s707 + $0x1c] sm:$0xf]
    %v716 = vld [vmem:[%s707 + $0x20] sm:$0xf]
    %v717 = vld [vmem:[%s707 + $0x24] sm:$0xf]
    %v718 = vld [vmem:[%s707 + $0x28] sm:$0xf]
    %v719 = vld [vmem:[%s707 + $0x2c] sm:$0xf]
    %v720 = vld [vmem:[%s707 + $0x30] sm:$0xf]
    %v721 = vld [vmem:[%s707 + $0x34] sm:$0xf]
    %v722 = vld [vmem:[%s707 + $0x38] sm:$0xf]
    %v723 = vld [vmem:[%s707 + $0x3c] sm:$0xf]
    %v724 = vld [vmem:[#allocation8 + $0x3] sm:$0x1]
    %v725 = vlaneseq
    %v726 = vshrl.u32 %v725, 7
    %v727 = vsub.s32 0, %v726
    %v728 = vrot.slane %v724, %v727
    %v745 = vunpack.c.l.b16 %v708
    %v746 = vunpack.c.l.b16 %v709
    %v747 = vunpack.c.l.b16 %v710
    %v748 = vunpack.c.l.b16 %v711
    %v749 = vunpack.c.l.b16 %v712
    %v750 = vunpack.c.l.b16 %v713
    %v751 = vunpack.c.l.b16 %v714
    %v752 = vunpack.c.l.b16 %v715
    %v753 = vunpack.c.l.b16 %v716
    %v754 = vunpack.c.l.b16 %v717
    %v755 = vunpack.c.l.b16 %v718
    %v756 = vunpack.c.l.b16 %v719
    %v757 = vunpack.c.l.b16 %v720
    %v758 = vunpack.c.l.b16 %v721
    %v759 = vunpack.c.l.b16 %v722
    %v760 = vunpack.c.l.b16 %v723
    %v761 = vpack.c.b16 %v746, %v745
    %v762 = vpack.c.b16 %v748, %v747
    %v763 = vpack.c.b16 %v750, %v749
    %v764 = vpack.c.b16 %v752, %v751
    %v765 = vpack.c.b16 %v754, %v753
    %v766 = vpack.c.b16 %v756, %v755
    %v767 = vpack.c.b16 %v758, %v757
    %v768 = vpack.c.b16 %v760, %v759
    %777 = vmatprep.subr.bf16.mxu0 0
    %778 = vmatpush1.bf16.msra.mxu0 %v768
    %779 = vmatprep.subr.bf16.mxu0 0
    %780 = vmatpush1.bf16.msra.mxu0 %v767
    %781 = vmatprep.subr.bf16.mxu0 0
    %782 = vmatpush1.bf16.msra.mxu0 %v766
    %783 = vmatprep.subr.bf16.mxu0 0
    %784 = vmatpush1.bf16.msra.mxu0 %v765
    %785 = vmatprep.subr.bf16.mxu0 0
    %786 = vmatpush1.bf16.msra.mxu0 %v764
    %787 = vmatprep.subr.bf16.mxu0 0
    %788 = vmatpush1.bf16.msra.mxu0 %v763
    %789 = vmatprep.subr.bf16.mxu0 0
    %790 = vmatpush1.bf16.msra.mxu0 %v762
    %791 = vmatprep.subr.bf16.mxu0 0
    %792 = vmatpush1.bf16.msra.mxu0 %v761
    %793 = vmatprep.subr.bf16.mxu0 0
    %794 = vmatpush2.bf16.msra.mxu0 0
    %795 = vmatprep.subr.bf16.mxu0 0
    %796 = vmatpush2.bf16.msra.mxu0 0
    %797 = vmatprep.subr.bf16.mxu0 0
    %798 = vmatpush2.bf16.msra.mxu0 0
    %799 = vmatprep.subr.bf16.mxu0 0
    %800 = vmatpush2.bf16.msra.mxu0 0
    %801 = vmatprep.subr.bf16.mxu0 0
    %802 = vmatpush2.bf16.msra.mxu0 0
    %803 = vmatprep.subr.bf16.mxu0 0
    %804 = vmatpush2.bf16.msra.mxu0 0
    %805 = vmatprep.subr.bf16.mxu0 0
    %806 = vmatpush2.bf16.msra.mxu0 0
    %807 = vmatprep.subr.bf16.mxu0 0
    %808 = vmatpush2.bf16.msra.mxu0 0
    %809 = vmatprep.mubr.bf16.mxu0 0
    %810 = vmatmul.mubr.bf16.gmra.mxu0 %v699
    %v811 = vpop.f32.mrf.mxu0
    %v812 = vadd.f32 %v728, %v811
    %v813 = vpop.f32.mrf.mxu0
    %v814 = vpop.f32.mrf.mxu0
    %v815 = vadd.f32 %v728, %v814
    %v816 = vpop.f32.mrf.mxu0
    %817 = vmatprep.mubr.bf16.mxu0 0
    %818 = vmatmul.mubr.bf16.gmra.mxu0 %v700
    %v819 = vpop.f32.mrf.mxu0
    %v820 = vadd.f32 %v728, %v819
    %v821 = vpop.f32.mrf.mxu0
    %v822 = vpop.f32.mrf.mxu0
    %v823 = vadd.f32 %v728, %v822
    %v824 = vpop.f32.mrf.mxu0
    %825 = vmatprep.mubr.bf16.mxu0 0
    %826 = vmatmul.mubr.bf16.gmra.mxu0 %v701
    %v827 = vpop.f32.mrf.mxu0
    %v828 = vadd.f32 %v728, %v827
    %v829 = vpop.f32.mrf.mxu0
    %v830 = vpop.f32.mrf.mxu0
    %v831 = vadd.f32 %v728, %v830
    %v832 = vpop.f32.mrf.mxu0
    %833 = vmatprep.mubr.bf16.mxu0 0
    %834 = vmatmul.mubr.bf16.gmra.mxu0 %v702
    %v835 = vpop.f32.mrf.mxu0
    %v836 = vadd.f32 %v728, %v835
    %v837 = vpop.f32.mrf.mxu0
    %v838 = vpop.f32.mrf.mxu0
    %v839 = vadd.f32 %v728, %v838
    %v840 = vpop.f32.mrf.mxu0
    %841 = vmatprep.mubr.bf16.mxu0 0
    %842 = vmatmul.mubr.bf16.gmra.mxu0 %v703
    %v843 = vpop.f32.mrf.mxu0
    %v844 = vadd.f32 %v728, %v843
    %v845 = vpop.f32.mrf.mxu0
    %v846 = vpop.f32.mrf.mxu0
    %v847 = vadd.f32 %v728, %v846
    %v848 = vpop.f32.mrf.mxu0
    %849 = vmatprep.mubr.bf16.mxu0 0
    %850 = vmatmul.mubr.bf16.gmra.mxu0 %v704
    %v851 = vpop.f32.mrf.mxu0
    %v852 = vadd.f32 %v728, %v851
    %v853 = vpop.f32.mrf.mxu0
    %v854 = vpop.f32.mrf.mxu0
    %v855 = vadd.f32 %v728, %v854
    %v856 = vpop.f32.mrf.mxu0
    %857 = vmatprep.mubr.bf16.mxu0 0
    %858 = vmatmul.mubr.bf16.gmra.mxu0 %v705
    %v859 = vpop.f32.mrf.mxu0
    %v860 = vadd.f32 %v728, %v859
    %v861 = vpop.f32.mrf.mxu0
    %v862 = vpop.f32.mrf.mxu0
    %v863 = vadd.f32 %v728, %v862
    %v864 = vpop.f32.mrf.mxu0
    %865 = vmatprep.mubr.bf16.mxu0 0
    %866 = vmatmul.mubr.bf16.gmra.mxu0 %v706
    %v867 = vpop.f32.mrf.mxu0
    %v868 = vadd.f32 %v728, %v867
    %v869 = vpop.f32.mrf.mxu0
    %v870 = vpop.f32.mrf.mxu0
    %v871 = vadd.f32 %v728, %v870
    %v872 = vpop.f32.mrf.mxu0
    %873 = vdwg.mxu0
    %v874 = vmax.f32 %v812, 0.0
    %v875 = vmax.f32 %v815, 0.0
    %v876 = vmax.f32 %v820, 0.0
    %v877 = vmax.f32 %v823, 0.0
    %v878 = vmax.f32 %v828, 0.0
    %v879 = vmax.f32 %v831, 0.0
    %v880 = vmax.f32 %v836, 0.0
    %v881 = vmax.f32 %v839, 0.0
    %v882 = vmax.f32 %v844, 0.0
    %v883 = vmax.f32 %v847, 0.0
    %v884 = vmax.f32 %v852, 0.0
    %v885 = vmax.f32 %v855, 0.0
    %v886 = vmax.f32 %v860, 0.0
    %v887 = vmax.f32 %v863, 0.0
    %v888 = vmax.f32 %v868, 0.0
    %v889 = vmax.f32 %v871, 0.0
    %v890 = vpack.c.bf16 %v875, %v874
    %v891 = vpack.c.bf16 %v877, %v876
    %v892 = vpack.c.bf16 %v879, %v878
    %v893 = vpack.c.bf16 %v881, %v880
    %v894 = vpack.c.bf16 %v883, %v882
    %v895 = vpack.c.bf16 %v885, %v884
    %v896 = vpack.c.bf16 %v887, %v886
    %v897 = vpack.c.bf16 %v889, %v888
    %s898 = scalar_lea.vmem [#allocation7], 192
    %v899 = vld [vmem:[%s898] sm:$0xf]
    %v900 = vld [vmem:[%s898 + $0x4] sm:$0xf]
    %v901 = vld [vmem:[%s898 + $0x8] sm:$0xf]
    %v902 = vld [vmem:[%s898 + $0xc] sm:$0xf]
    %v903 = vld [vmem:[%s898 + $0x10] sm:$0xf]
    %v904 = vld [vmem:[%s898 + $0x14] sm:$0xf]
    %v905 = vld [vmem:[%s898 + $0x18] sm:$0xf]
    %v906 = vld [vmem:[%s898 + $0x1c] sm:$0xf]
    %v907 = vld [vmem:[%s898 + $0x20] sm:$0xf]
    %v908 = vld [vmem:[%s898 + $0x24] sm:$0xf]
    %v909 = vld [vmem:[%s898 + $0x28] sm:$0xf]
    %v910 = vld [vmem:[%s898 + $0x2c] sm:$0xf]
    %v911 = vld [vmem:[%s898 + $0x30] sm:$0xf]
    %v912 = vld [vmem:[%s898 + $0x34] sm:$0xf]
    %v913 = vld [vmem:[%s898 + $0x38] sm:$0xf]
    %v914 = vld [vmem:[%s898 + $0x3c] sm:$0xf]
    %v915 = vld [vmem:[#allocation8 + $0x4] sm:$0x1]
    %v916 = vlaneseq
    %v917 = vshrl.u32 %v916, 7
    %v918 = vsub.s32 0, %v917
    %v919 = vrot.slane %v915, %v918
    %v936 = vunpack.c.l.b16 %v899
    %v937 = vunpack.c.l.b16 %v900
    %v938 = vunpack.c.l.b16 %v901
    %v939 = vunpack.c.l.b16 %v902
    %v940 = vunpack.c.l.b16 %v903
    %v941 = vunpack.c.l.b16 %v904
    %v942 = vunpack.c.l.b16 %v905
    %v943 = vunpack.c.l.b16 %v906
    %v944 = vunpack.c.l.b16 %v907
    %v945 = vunpack.c.l.b16 %v908
    %v946 = vunpack.c.l.b16 %v909
    %v947 = vunpack.c.l.b16 %v910
    %v948 = vunpack.c.l.b16 %v911
    %v949 = vunpack.c.l.b16 %v912
    %v950 = vunpack.c.l.b16 %v913
    %v951 = vunpack.c.l.b16 %v914
    %v952 = vpack.c.b16 %v937, %v936
    %v953 = vpack.c.b16 %v939, %v938
    %v954 = vpack.c.b16 %v941, %v940
    %v955 = vpack.c.b16 %v943, %v942
    %v956 = vpack.c.b16 %v945, %v944
    %v957 = vpack.c.b16 %v947, %v946
    %v958 = vpack.c.b16 %v949, %v948
    %v959 = vpack.c.b16 %v951, %v950
    %968 = vmatprep.subr.bf16.mxu0 0
    %969 = vmatpush1.bf16.msra.mxu0 %v959
    %970 = vmatprep.subr.bf16.mxu0 0
    %971 = vmatpush1.bf16.msra.mxu0 %v958
    %972 = vmatprep.subr.bf16.mxu0 0
    %973 = vmatpush1.bf16.msra.mxu0 %v957
    %974 = vmatprep.subr.bf16.mxu0 0
    %975 = vmatpush1.bf16.msra.mxu0 %v956
    %976 = vmatprep.subr.bf16.mxu0 0
    %977 = vmatpush1.bf16.msra.mxu0 %v955
    %978 = vmatprep.subr.bf16.mxu0 0
    %979 = vmatpush1.bf16.msra.mxu0 %v954
    %980 = vmatprep.subr.bf16.mxu0 0
    %981 = vmatpush1.bf16.msra.mxu0 %v953
    %982 = vmatprep.subr.bf16.mxu0 0
    %983 = vmatpush1.bf16.msra.mxu0 %v952
    %984 = vmatprep.subr.bf16.mxu0 0
    %985 = vmatpush2.bf16.msra.mxu0 0
    %986 = vmatprep.subr.bf16.mxu0 0
    %987 = vmatpush2.bf16.msra.mxu0 0
    %988 = vmatprep.subr.bf16.mxu0 0
    %989 = vmatpush2.bf16.msra.mxu0 0
    %990 = vmatprep.subr.bf16.mxu0 0
    %991 = vmatpush2.bf16.msra.mxu0 0
    %992 = vmatprep.subr.bf16.mxu0 0
    %993 = vmatpush2.bf16.msra.mxu0 0
    %994 = vmatprep.subr.bf16.mxu0 0
    %995 = vmatpush2.bf16.msra.mxu0 0
    %996 = vmatprep.subr.bf16.mxu0 0
    %997 = vmatpush2.bf16.msra.mxu0 0
    %998 = vmatprep.subr.bf16.mxu0 0
    %999 = vmatpush2.bf16.msra.mxu0 0
    %1000 = vmatprep.mubr.bf16.mxu0 0
    %1001 = vmatmul.mubr.bf16.gmra.mxu0 %v890
    %v1002 = vpop.f32.mrf.mxu0
    %v1003 = vadd.f32 %v919, %v1002
    %v1004 = vpop.f32.mrf.mxu0
    %v1005 = vpop.f32.mrf.mxu0
    %v1006 = vadd.f32 %v919, %v1005
    %v1007 = vpop.f32.mrf.mxu0
    %1008 = vmatprep.mubr.bf16.mxu0 0
    %1009 = vmatmul.mubr.bf16.gmra.mxu0 %v891
    %v1010 = vpop.f32.mrf.mxu0
    %v1011 = vadd.f32 %v919, %v1010
    %v1012 = vpop.f32.mrf.mxu0
    %v1013 = vpop.f32.mrf.mxu0
    %v1014 = vadd.f32 %v919, %v1013
    %v1015 = vpop.f32.mrf.mxu0
    %1016 = vmatprep.mubr.bf16.mxu0 0
    %1017 = vmatmul.mubr.bf16.gmra.mxu0 %v892
    %v1018 = vpop.f32.mrf.mxu0
    %v1019 = vadd.f32 %v919, %v1018
    %v1020 = vpop.f32.mrf.mxu0
    %v1021 = vpop.f32.mrf.mxu0
    %v1022 = vadd.f32 %v919, %v1021
    %v1023 = vpop.f32.mrf.mxu0
    %1024 = vmatprep.mubr.bf16.mxu0 0
    %1025 = vmatmul.mubr.bf16.gmra.mxu0 %v893
    %v1026 = vpop.f32.mrf.mxu0
    %v1027 = vadd.f32 %v919, %v1026
    %v1028 = vpop.f32.mrf.mxu0
    %v1029 = vpop.f32.mrf.mxu0
    %v1030 = vadd.f32 %v919, %v1029
    %v1031 = vpop.f32.mrf.mxu0
    %1032 = vmatprep.mubr.bf16.mxu0 0
    %1033 = vmatmul.mubr.bf16.gmra.mxu0 %v894
    %v1034 = vpop.f32.mrf.mxu0
    %v1035 = vadd.f32 %v919, %v1034
    %v1036 = vpop.f32.mrf.mxu0
    %v1037 = vpop.f32.mrf.mxu0
    %v1038 = vadd.f32 %v919, %v1037
    %v1039 = vpop.f32.mrf.mxu0
    %1040 = vmatprep.mubr.bf16.mxu0 0
    %1041 = vmatmul.mubr.bf16.gmra.mxu0 %v895
    %v1042 = vpop.f32.mrf.mxu0
    %v1043 = vadd.f32 %v919, %v1042
    %v1044 = vpop.f32.mrf.mxu0
    %v1045 = vpop.f32.mrf.mxu0
    %v1046 = vadd.f32 %v919, %v1045
    %v1047 = vpop.f32.mrf.mxu0
    %1048 = vmatprep.mubr.bf16.mxu0 0
    %1049 = vmatmul.mubr.bf16.gmra.mxu0 %v896
    %v1050 = vpop.f32.mrf.mxu0
    %v1051 = vadd.f32 %v919, %v1050
    %v1052 = vpop.f32.mrf.mxu0
    %v1053 = vpop.f32.mrf.mxu0
    %v1054 = vadd.f32 %v919, %v1053
    %v1055 = vpop.f32.mrf.mxu0
    %1056 = vmatprep.mubr.bf16.mxu0 0
    %1057 = vmatmul.mubr.bf16.gmra.mxu0 %v897
    %v1058 = vpop.f32.mrf.mxu0
    %v1059 = vadd.f32 %v919, %v1058
    %v1060 = vpop.f32.mrf.mxu0
    %v1061 = vpop.f32.mrf.mxu0
    %v1062 = vadd.f32 %v919, %v1061
    %v1063 = vpop.f32.mrf.mxu0
    %1064 = vdwg.mxu0
    %1065 = vst [vmem:[#allocation10] sm:$0xff] %v1003
    %1066 = vst [vmem:[#allocation10 + $0x8] sm:$0xff] %v1006
    %1067 = vst [vmem:[#allocation10 + $0x10] sm:$0xff] %v1011
    %1068 = vst [vmem:[#allocation10 + $0x18] sm:$0xff] %v1014
    %1069 = vst [vmem:[#allocation10 + $0x20] sm:$0xff] %v1019
    %1070 = vst [vmem:[#allocation10 + $0x28] sm:$0xff] %v1022
    %1071 = vst [vmem:[#allocation10 + $0x30] sm:$0xff] %v1027
    %1072 = vst [vmem:[#allocation10 + $0x38] sm:$0xff] %v1030
    %1073 = vst [vmem:[#allocation10 + $0x40] sm:$0xff] %v1035
    %1074 = vst [vmem:[#allocation10 + $0x48] sm:$0xff] %v1038
    %1075 = vst [vmem:[#allocation10 + $0x50] sm:$0xff] %v1043
    %1076 = vst [vmem:[#allocation10 + $0x58] sm:$0xff] %v1046
    %1077 = vst [vmem:[#allocation10 + $0x60] sm:$0xff] %v1051
    %1078 = vst [vmem:[#allocation10 + $0x68] sm:$0xff] %v1054
    %1079 = vst [vmem:[#allocation10 + $0x70] sm:$0xff] %v1059
    %1080 = vst [vmem:[#allocation10 + $0x78] sm:$0xff] %v1062
    // Predicated region
    $region34: #{tpu_custom_call.1} parent=1 // pred_check
      _
    $region35: #{tpu_custom_call.1} parent=1 // pred_check_branch
      %1082 = sbr.rel (0) target = $region37
    $region36: #{tpu_custom_call.1} parent=1 // pred_region
      %s1084 = ssub.s32 2048, 2048
      %1085 = vsyncadd [#allocation4], %s1084
      %s1086 = sshll.u32 [#allocation10], 4
      %s1087 = int_to_ptr.vmem [resolvable:$true] %s1086
      %1092 = dma.vmem_to_hbm [thread:$0]  %s1087, 2048, %s4, [#allocation4], 128, 128, 8
    $region37: #{tpu_custom_call.1} parent=1 // pred_fallthru
      _
    // Predicated region
    $region38: #{tpu_custom_call.1} parent=1 // pred_check
      _
    $region39: #{tpu_custom_call.1} parent=1 // pred_check_branch
      %1094 = sbr.rel (0) target = $region41
    $region40: #{tpu_custom_call.1} parent=1 // pred_region
      %1095 = dma.done [#allocation4], 2048
    $region41: #{tpu_custom_call.1} parent=1 // pred_fallthru
      _
    %1096 = vsyncpa [#allocation3], 1
    %1097 = vsyncpa [#allocation6], 1
    %1098 = vsyncpa [#allocation9], 1
    %1099 = vsyncpa [#allocation4], 1

</llo_original>
